<compile_context>
chip_gen: v7x
topology: tpu7x:2x2x1
jax: 0.10.0
libtpu: 0.0.40
codegen_flags: <defaults>
</compile_context>

<pallas_src>
import math

import jax
import jax.numpy as jnp
import numpy as np
from jax.experimental import pallas as pl
from jax.experimental.pallas import tpu as pltpu


# ---------------------------------------------------------------------------
# Parameter / operator construction (plain Python / numpy glue)
# ---------------------------------------------------------------------------
def build_filter(pos, freq, POS):
    result = math.cos(math.pi * freq * (pos + 0.5) / POS) / math.sqrt(POS)
    if freq == 0:
        return result
    return result * math.sqrt(2)


def get_freq_indices(method):
    num_freq = int(method[3:])
    all_top_indices_x = [0, 0, 6, 0, 0, 1, 1, 4, 5, 1, 3, 0, 0, 0, 3, 2,
                         4, 6, 3, 5, 5, 2, 6, 5, 5, 3, 3, 4, 2, 2, 6, 1]
    all_top_indices_y = [0, 1, 0, 5, 2, 0, 2, 0, 0, 6, 0, 4, 6, 3, 5, 2,
                         6, 3, 3, 3, 5, 1, 1, 2, 4, 2, 1, 1, 3, 0, 5, 3]
    assert 'top' in method  # only 'top' selection needed for this module config
    return all_top_indices_x[:num_freq], all_top_indices_y[:num_freq]


def get_dct_filter_2d(tile_x, tile_y, mx, my):
    f = np.zeros((tile_x, tile_y), dtype=np.float64)
    for tx in range(tile_x):
        for ty in range(tile_y):
            f[tx, ty] = build_filter(tx, mx, tile_x) * build_filter(ty, my, tile_y)
    return f


def adaptive_pool_matrix(out_size, in_size):
    """Row-stochastic matrix P (out, in) s.t. P @ v == adaptive_avg_pool1d(v)."""
    P = np.zeros((out_size, in_size), dtype=np.float64)
    for i in range(out_size):
        start = (i * in_size) // out_size
        end = -((-(i + 1) * in_size) // out_size)  # ceil((i+1)*in/out)
        P[i, start:end] = 1.0 / (end - start)
    return P


def make_operator(in_channels, dct_h, dct_w, H, W,
                  frequency_branches=16, frequency_selection='top',
                  dtype=jnp.bfloat16):
    """Build M^T, (H*W, H*W), s.t. out_flat = x_flat @ M^T (per channel slice).

    The DCT weight buffers of the PyTorch module are identical across channels,
    so `in_channels` does not influence the operator; kept for API parity.
    `dtype=bfloat16` gives native-rate MXU operands (the kernel accumulates in f32).
    """
    del in_channels
    mapper_x, mapper_y = get_freq_indices(frequency_selection + str(frequency_branches))
    mapper_x = [mx * (dct_h // 7) for mx in mapper_x]
    mapper_y = [my * (dct_w // 7) for my in mapper_y]

    # summed DCT weight over the frequency branches, with 1/F folded in
    w_sum = np.zeros((dct_h, dct_w), dtype=np.float64)
    for mx, my in zip(mapper_x, mapper_y):
        w_sum += get_dct_filter_2d(dct_h, dct_w, mx, my)
    w_sum /= float(frequency_branches)

    d_h = adaptive_pool_matrix(dct_h, H)        # (dct_h, H)
    d_w = adaptive_pool_matrix(dct_w, W)        # (dct_w, W)
    u_h = adaptive_pool_matrix(H, dct_h)        # (H, dct_h)
    u_w = adaptive_pool_matrix(W, dct_w)        # (W, dct_w)

    # row-major vec identity: vec(A X B^T) = (A kron B) vec(X)
    down = np.kron(d_h, d_w)                    # (dct_h*dct_w, H*W)
    up = np.kron(u_h, u_w)                      # (H*W, dct_h*dct_w)
    M = up @ (w_sum.reshape(-1, 1) * down)      # (H*W, H*W)
    return jnp.asarray(M.T, dtype=dtype)        # pass M^T so kernel does x @ M^T


# ---------------------------------------------------------------------------
# Pallas kernel
# ---------------------------------------------------------------------------
def _dct_hf_kernel(x_ref, m_ref, o_ref):
    # (TC, H*W) @ (H*W, H*W) -> (TC, H*W): lane-dense operands, single MXU op.
    # x is cast to the operator dtype (bf16) so the MXU runs at native rate;
    # accumulation stays in f32 via preferred_element_type.
    x = x_ref[...].astype(m_ref.dtype)
    o_ref[...] = jnp.dot(x, m_ref[...],
                         preferred_element_type=jnp.float32).astype(o_ref.dtype)


def _vmem_capacity_bytes():
    """Generation-aware physical VMEM size (64 MiB v7x, 128 MiB v5e/v6e)."""
    try:
        return int(pltpu.get_tpu_info().vmem_capacity_bytes)
    except Exception:            # query unavailable (e.g. interpret mode)
        return 128 << 20


def _pick_row_tile(n_rows, itemsize, *, min_steps=4):
    """Row tile + grid-step count over the (padded) B*C axis.

    * sublane multiple is dtype-dependent (8 f32 / 16 bf16 / 32 int8) so the
      x/out stores stay unmasked for any activation dtype,
    * the tile is as large as possible (cap 1024 rows f32 / 2048 bf16) while
      keeping >= min_steps grid steps so v7x's two TensorCores both get work
      and DMA/compute overlap has enough iterations,
    * n_rows that don't divide are handled by padding in the wrapper.
    """
    sublane = max(8, 32 // itemsize)
    cap = 4096 // itemsize
    tc = (n_rows // min_steps) // sublane * sublane
    tc = max(sublane, min(cap, tc))
    steps = max(min_steps, pl.cdiv(n_rows, tc))
    return tc, steps


def dct_high_frequency_extractor(x, m_t, *, channel_tile=None, min_steps=4):
    """x: (B, C, H, W); m_t: (H*W, H*W) fused operator from make_operator."""
    B, C, H, W = x.shape
    HW = H * W
    N = B * C
    assert m_t.shape == (HW, HW)

    itemsize = jnp.dtype(x.dtype).itemsize
    m_itemsize = jnp.dtype(m_t.dtype).itemsize

    if channel_tile is None:
        tc, steps = _pick_row_tile(N, itemsize, min_steps=min_steps)
    else:
        tc = int(channel_tile)
        sublane = max(8, 32 // itemsize)
        assert tc % sublane == 0, "channel_tile must be a multiple of the sublane tiling"
        steps = max(min_steps, pl.cdiv(N, tc))

    n_pad = steps * tc
    x2 = x.reshape(N, HW)                       # free layout plumbing (row-major)
    if n_pad != N:
        x2 = jnp.pad(x2, ((0, n_pad - N), (0, 0)))

    # VMEM: double-buffered x/out tiles + double-buffered operator + headroom,
    # capped generation-aware at ~55% of physical VMEM.
    need = 2 * 2 * tc * HW * itemsize + 2 * HW * HW * m_itemsize + (2 << 20)
    cap55 = int(0.55 * _vmem_capacity_bytes())
    vmem_bytes = int(min(cap55, 16 << 20))      # modest default, chip-safe
    vmem_bytes = max(vmem_bytes, need)          # never below what the tiles need

    cost = pl.CostEstimate(
        flops=2 * n_pad * HW * HW,
        transcendentals=0,
        bytes_accessed=n_pad * HW * itemsize        # x read
                       + n_pad * HW * itemsize      # out write
                       + HW * HW * m_itemsize,      # operator (fetched once)
    )

    out2 = pl.pallas_call(
        _dct_hf_kernel,
        out_shape=jax.ShapeDtypeStruct((n_pad, HW), x.dtype),
        grid_spec=pltpu.PrefetchScalarGridSpec(
            num_scalar_prefetch=0,
            grid=(steps,),
            in_specs=[
                pl.BlockSpec((tc, HW), lambda i: (i, 0)),   # x tile (lane-dense)
                pl.BlockSpec((HW, HW), lambda i: (0, 0)),   # fused operator, fetched once
            ],
            out_specs=pl.BlockSpec((tc, HW), lambda i: (i, 0)),
        ),
        compiler_params=pltpu.CompilerParams(
            dimension_semantics=("parallel",),
            vmem_limit_bytes=vmem_bytes),
        cost_estimate=cost,
    )(x2, m_t)
    return out2[:N].reshape(B, C, H, W)


# ---------------------------------------------------------------------------
# Pure-JAX reference (mirrors the PyTorch loop over frequency branches)
# ---------------------------------------------------------------------------
def reference(x, dct_h, dct_w, in_channels, num_freq):
    B, C, H, W = x.shape
    d_h = jnp.asarray(adaptive_pool_matrix(dct_h, H), dtype=jnp.float32)
    d_w = jnp.asarray(adaptive_pool_matrix(dct_w, W), dtype=jnp.float32)
    u_h = jnp.asarray(adaptive_pool_matrix(H, dct_h), dtype=jnp.float32)
    u_w = jnp.asarray(adaptive_pool_matrix(W, dct_w), dtype=jnp.float32)

    mapper_x, mapper_y = get_freq_indices('top' + str(num_freq))
    mapper_x = [mx * (dct_h // 7) for mx in mapper_x]
    mapper_y = [my * (dct_w // 7) for my in mapper_y]

    x_pooled = jnp.einsum('hH,bcHW,wW->bchw', d_h, x, d_w)
    acc = jnp.zeros((B, C, H, W), jnp.float32)
    for mx, my in zip(mapper_x, mapper_y):
        f2d = jnp.asarray(get_dct_filter_2d(dct_h, dct_w, mx, my), dtype=jnp.float32)
        xs = x_pooled * f2d[None, None]
        acc = acc + jnp.einsum('Hh,bchw,Ww->bcHW', u_h, xs, u_w)
    return acc / num_freq


# ---------------------------------------------------------------------------
if __name__ == "__main__":
    B, C, H, W = 2, 4, 16, 16
    dct_h, dct_w = 7, 7
    num_freq = 16

    key = jax.random.PRNGKey(0)
    x = jax.random.normal(key, (B, C, H, W), dtype=jnp.float32)

    # bf16 operator -> native-rate MXU operands; kernel accumulates in f32.
    m_t = make_operator(C, dct_h, dct_w, H, W,
                        frequency_branches=num_freq, frequency_selection='top',
                        dtype=jnp.bfloat16)

    out = jax.block_until_ready(dct_high_frequency_extractor(x, m_t))
    assert out.shape == (B, C, H, W)
    assert out.dtype == x.dtype

    # (a) matched-precision reference (same bf16 operands, f32 accumulation):
    #     tight check that the kernel's tiling / padding / matmul is exact.
    x2 = x.reshape(B * C, H * W)
    matched = jnp.dot(x2.astype(m_t.dtype), m_t,
                      preferred_element_type=jnp.float32).reshape(B, C, H, W)
    np.testing.assert_allclose(np.asarray(out), np.asarray(matched),
                               rtol=1e-4, atol=1e-6)

    # (b) full-precision reference mirroring the PyTorch module; tolerance sized
    #     for the ~2^-9 relative rounding of bf16 operator/activation operands.
    ref = jax.block_until_ready(reference(x, dct_h, dct_w, C, num_freq))
    np.testing.assert_allclose(np.asarray(out), np.asarray(ref),
                               rtol=5e-2, atol=5e-3)

    print("KERNEL_OK")
</pallas_src>

<mosaic_0001>
module attributes {stable_mosaic.version = 11 : i64} {
  func.func @_dct_hf_kernel(%arg0: i32, %arg1: memref<8x256xf32, #tpu.memory_space<vmem>>, %arg2: memref<256x256xbf16, #tpu.memory_space<vmem>>, %arg3: memref<8x256xf32, #tpu.memory_space<vmem>>) attributes {dimension_semantics = [#tpu.dimension_semantics<parallel>], iteration_bounds = array<i64: 4>, scalar_prefetch = 0 : i64, scratch_operands = 0 : i64, tpu.core_type = #tpu.core_type<tc>, window_params = [{transform_indices = @transform_0, window_bounds = array<i64: 8, 256>}, {pipeline_mode = #tpu.pipeline_mode<synchronous>, transform_indices = @transform_1, window_bounds = array<i64: 256, 256>}, {transform_indices = @transform_2, window_bounds = array<i64: 8, 256>}]} {
    %c0 = arith.constant 0 : index
    %c0_0 = arith.constant 0 : index
    %0 = vector.load %arg1[%c0, %c0_0] : memref<8x256xf32, #tpu.memory_space<vmem>>, vector<8x256xf32>
    %1 = arith.truncf %0 : vector<8x256xf32> to vector<8x256xbf16>
    %c0_1 = arith.constant 0 : index
    %c0_2 = arith.constant 0 : index
    %2 = vector.load %arg2[%c0_1, %c0_2] : memref<256x256xbf16, #tpu.memory_space<vmem>>, vector<256x256xbf16>
    %cst = arith.constant dense<0.000000e+00> : vector<8x256xf32>
    %3 = tpu.matmul %1, %2, %cst {dimension_numbers = #tpu.dot_dimension_numbers<[1], [0], [0], [1], [0, 0, 1, 1], [], []>} : vector<8x256xbf16>, vector<256x256xbf16>, vector<8x256xf32> -> vector<8x256xf32>
    %c0_3 = arith.constant 0 : index
    %c0_4 = arith.constant 0 : index
    %4 = vector.load %arg3[%c0_3, %c0_4] : memref<8x256xf32, #tpu.memory_space<vmem>>, vector<8x256xf32>
    tpu.vector_store %arg3[%c0_3, %c0_4], %3 {strides = array<i32>} : memref<8x256xf32, #tpu.memory_space<vmem>>, vector<8x256xf32>,
    return
  }
  func.func @transform_0(%arg0: i32) -> (i32, i32) {
    %c0_i32 = arith.constant 0 : i32
    %c0_i32_0 = arith.constant 0 : i32
    return %arg0, %c0_i32 : i32, i32
  }
  func.func @transform_1(%arg0: i32) -> (i32, i32) {
    %c0_i32 = arith.constant 0 : i32
    %c0_i32_0 = arith.constant 0 : i32
    %c0_i32_1 = arith.constant 0 : i32
    return %c0_i32, %c0_i32_0 : i32, i32
  }
  func.func @transform_2(%arg0: i32) -> (i32, i32) {
    %c0_i32 = arith.constant 0 : i32
    %c0_i32_0 = arith.constant 0 : i32
    return %arg0, %c0_i32 : i32, i32
  }
}

</mosaic_0001>

<llo_original>
// kernel: tpu_custom_call.1
$region0: #{tpu_custom_call.1}
  #allocation0 [shape = 'u32[]', space=smem, size = 0x4, offset = 0x4, fixed_abs, tag = 'smem constant byte address 0x4 - core index']
  #allocation1 [shape = 'u32[144,128]{1,0:T(1,128)}', space=vmem, size = 0x12000, scoped, tag = 'internal scratch']
  %s0 = inlined_call_operand.hbm [shape: f32[32,256], index: 0, kind: input, shape index: {}]
  %s1 = inlined_call_operand.hbm [shape: bf16[256,256], index: 1, kind: input, shape index: {}]
  %s2 = inlined_call_operand.hbm [shape: f32[32,256], index: 2, kind: output, shape index: {}]
  %s3 = sld [smem:[#allocation0]]
  $region49: #{tpu_custom_call.1} parent=0
    _
  %s5 = ssub.s32 1, %s3
  %s6 = scalar_select 0, %s5, %s3
  $region1: #{tpu_custom_call.1} parent=0
    #allocation2 [shape = 'u8[16384]{0}', space=vmem, size = 0x4000, scoped, tag = 'input window, operand 0']
    #allocation3 [shape = 's32[2]{0}', space=sflag, size = 0x8, scoped, tag = 'scoped memory for tpu_custom_call.1']
    #allocation4 [shape = 's32[2]{0}', space=sflag, size = 0x8, scoped, tag = 'scoped memory for tpu_custom_call.1']
    #allocation5 [shape = 'u8[131072]{0}', space=vmem, size = 0x20000, scoped, tag = 'input window, operand 1, single buffered']
    #allocation6 [shape = 's32[1]{0}', space=sflag, size = 0x4, scoped, tag = 'scoped memory for tpu_custom_call.1']
    #allocation7 [shape = 'u8[16384]{0}', space=vmem, size = 0x4000, scoped, tag = 'output window, operand 0']
    %7 = vsyncpa [#allocation3], 0
    %s8 = scalar_lea.sflag [#allocation3], 1
    %9 = vsyncpa %s8, 0
    %10 = vsyncpa [#allocation6], 0
    %11 = vsyncpa [#allocation4], 0
    %s12 = scalar_lea.sflag [#allocation4], 1
    %13 = vsyncpa %s12, 0
    loop: start=0, step=1, limit=6
    $region2: #{tpu_custom_call.1} parent=1 // loop_pre_header
      _
    $region3: #{tpu_custom_call.1} parent=1 // loop_header
      %s15 = sphi 0, %s19
      %p16 = scmp.ge.s32.totalorder %s15, 6
      %s25 = sphi 0, %s27
      %s28 = sphi 0, %s25
      %s29 = sphi 0, %s28
      %s45 = sphi 0, %s29
      %s49 = sphi 0, %s49
      %s51 = sphi 0, %s49
      %s52 = sphi 0, %s51
      %s66 = sphi 0, %s52
      %s72 = sphi 0, %s74
      %s75 = sphi 0, %s72
      %s76 = sphi 0, %s75
      %s92 = sphi 0, %s76
    $region4: #{tpu_custom_call.1} parent=1 // loop_header_branch
      %18 = sbr.rel (%p16) target = $region8
    $region5: #{tpu_custom_call.1} parent=1 // loop_body
      %s20 = ssub.s32 %s15, 1
      %s21 = ssub.s32 %s15, 2
      %s22 = sadd.s32 %s15, 1
      %s23 = ssub.s32 %s15, %s22
      %p24 = scmp.eq.s32.totalorder %s23, 0
      %s26 = sadd.s32 %s25, 1
      %s27 = scalar_select %p24, %s25, %s26
      %p30 = pneg %p24
      %p31 = scmp.eq.s32.totalorder %s15, 3
      %p32 = por %p30, %p31
      %p33 = scmp.ne.s32.totalorder %s25, %s28
      %p34 = scmp.eq.s32.totalorder %s15, 0
      %p35 = por %p33, %p34
      %p36 = scmp.ne.s32.totalorder %s25, %s28
      %p37 = scmp.eq.s32.totalorder %s20, 3
      %p38 = por %p36, %p37
      %p39 = scmp.ne.s32.totalorder %s28, %s29
      %p40 = scmp.eq.s32.totalorder %s20, 0
      %p41 = por %p39, %p40
      %p42 = scmp.ne.s32.totalorder %s28, %s29
      %p43 = scmp.eq.s32.totalorder %s21, 3
      %p44 = por %p42, %p43
      %p46 = scmp.ne.s32.totalorder %s29, %s45
      %p47 = scmp.eq.s32.totalorder %s21, 0
      %p48 = por %p46, %p47
      %s50 = sadd.s32 %s49, 1
      %p53 = scmp.eq.s32.totalorder %s15, 3
      %p54 = scmp.ne.s32.totalorder %s49, %s51
      %p55 = scmp.eq.s32.totalorder %s15, 0
      %p56 = por %p54, %p55
      %p57 = scmp.ne.s32.totalorder %s49, %s51
      %p58 = scmp.eq.s32.totalorder %s20, 3
      %p59 = por %p57, %p58
      %p60 = scmp.ne.s32.totalorder %s51, %s52
      %p61 = scmp.eq.s32.totalorder %s20, 0
      %p62 = por %p60, %p61
      %p63 = scmp.ne.s32.totalorder %s51, %s52
      %p64 = scmp.eq.s32.totalorder %s21, 3
      %p65 = por %p63, %p64
      %p67 = scmp.ne.s32.totalorder %s52, %s66
      %p68 = scmp.eq.s32.totalorder %s21, 0
      %p69 = por %p67, %p68
      %s70 = ssub.s32 %s15, %s22
      %p71 = scmp.eq.s32.totalorder %s70, 0
      %s73 = sadd.s32 %s72, 1
      %s74 = scalar_select %p71, %s72, %s73
      %p77 = pneg %p71
      %p78 = scmp.eq.s32.totalorder %s15, 3
      %p79 = por %p77, %p78
      %p80 = scmp.ne.s32.totalorder %s72, %s75
      %p81 = scmp.eq.s32.totalorder %s15, 0
      %p82 = por %p80, %p81
      %p83 = scmp.ne.s32.totalorder %s72, %s75
      %p84 = scmp.eq.s32.totalorder %s20, 3
      %p85 = por %p83, %p84
      %p86 = scmp.ne.s32.totalorder %s75, %s76
      %p87 = scmp.eq.s32.totalorder %s20, 0
      %p88 = por %p86, %p87
      %p89 = scmp.ne.s32.totalorder %s75, %s76
      %p90 = scmp.eq.s32.totalorder %s21, 3
      %p91 = por %p89, %p90
      %p93 = scmp.ne.s32.totalorder %s76, %s92
      %p94 = scmp.eq.s32.totalorder %s21, 0
      %p95 = por %p93, %p94
      %p96 = scmp.le.s32.totalorder 1, %s15
      %p97 = scmp.lt.s32.totalorder %s15, 5
      %p98 = pnand %p96, %p97
      %p99 = pneg %p98
      // Predicated region
      $region9: #{tpu_custom_call.1} parent=5 // pred_check
        _
      $region10: #{tpu_custom_call.1} parent=5 // pred_check_branch
        %101 = sbr.rel (%p98) target = $region12
      $region11: #{tpu_custom_call.1} parent=5 // pred_region
        %s102 = ssub.s32 %s15, 1
        // Predicated region
        $region13: #{tpu_custom_call.1} parent=11 // pred_check
          %p103 = pneg %p62
        $region14: #{tpu_custom_call.1} parent=11 // pred_check_branch
          %105 = sbr.rel (%p103) target = $region16
        $region15: #{tpu_custom_call.1} parent=11 // pred_region
          %s107 = ssub.s32 4096, 4096
          %108 = vsyncadd [#allocation6], %s107
          %s109 = sshll.u32 [#allocation5], 4
          %s110 = int_to_ptr.vmem [resolvable:$true] %s109
          %115 = dma.hbm_to_vmem [thread:$0]  %s1, 4096, %s110, [#allocation6], 128, 128, 8
        $region16: #{tpu_custom_call.1} parent=11 // pred_fallthru
          _
      $region12: #{tpu_custom_call.1} parent=5 // pred_fallthru
        _
      %p116 = scmp.lt.s32.totalorder %s15, 4
      // Predicated region
      $region17: #{tpu_custom_call.1} parent=5 // pred_check
        %p117 = pneg %p116
      $region18: #{tpu_custom_call.1} parent=5 // pred_check_branch
        %119 = sbr.rel (%p117) target = $region20
      $region19: #{tpu_custom_call.1} parent=5 // pred_region
        // Predicated region
        $region21: #{tpu_custom_call.1} parent=19 // pred_check
          %p120 = pneg %p35
        $region22: #{tpu_custom_call.1} parent=19 // pred_check_branch
          %122 = sbr.rel (%p120) target = $region24
        $region23: #{tpu_custom_call.1} parent=19 // pred_region
          %s123 = sand.u32 %s25, 1
          %s124 = scalar_lea.sflag [#allocation3], %s123
          %s125 = sand.u32 %s25, 1
          %s126 = smul.addr %s125, 16
          %s127 = scalar_lea.vmem [#allocation2], %s126
          %s129 = ssub.s32 256, 256
          %130 = vsyncadd %s124, %s129
          %s131 = smul.addr %s15, 2
          %s132 = smul.addr %s131, 128
          %s133 = scalar_lea.hbm %s0, %s132
          %s135 = sshll.u32 %s127, 4
          %s136 = int_to_ptr.vmem [resolvable:$true] %s135
          %138 = dma.hbm_to_vmem [thread:$0]  %s133, 256, %s136, %s124
        $region24: #{tpu_custom_call.1} parent=19 // pred_fallthru
          _
      $region20: #{tpu_custom_call.1} parent=5 // pred_fallthru
        _
      %p139 = scmp.le.s32.totalorder 1, %s15
      %p140 = scmp.lt.s32.totalorder %s15, 5
      %p141 = pnand %p139, %p140
      %p142 = pneg %p141
      // Predicated region
      $region25: #{tpu_custom_call.1} parent=5 // pred_check
        _
      $region26: #{tpu_custom_call.1} parent=5 // pred_check_branch
        %144 = sbr.rel (%p141) target = $region28
      $region27: #{tpu_custom_call.1} parent=5 // pred_region
        %s145 = ssub.s32 %s15, 1
        %s146 = sand.u32 %s28, 1
        %s147 = scalar_lea.sflag [#allocation3], %s146
        %s148 = sand.u32 %s28, 1
        %s149 = smul.addr %s148, 16
        %s150 = scalar_lea.vmem [#allocation2], %s149
        // Predicated region
        $region29: #{tpu_custom_call.1} parent=27 // pred_check
          %p151 = pneg %p41
        $region30: #{tpu_custom_call.1} parent=27 // pred_check_branch
          %153 = sbr.rel (%p151) target = $region32
        $region31: #{tpu_custom_call.1} parent=27 // pred_region
          %154 = dma.done %s147, 256
        $region32: #{tpu_custom_call.1} parent=27 // pred_fallthru
          _
        // Predicated region
        $region33: #{tpu_custom_call.1} parent=27 // pred_check
          %p155 = pneg %p62
        $region34: #{tpu_custom_call.1} parent=27 // pred_check_branch
          %157 = sbr.rel (%p155) target = $region36
        $region35: #{tpu_custom_call.1} parent=27 // pred_region
          %158 = dma.done [#allocation6], 4096
        $region36: #{tpu_custom_call.1} parent=27 // pred_fallthru
          _
        %s159 = sand.u32 %s28, 1
        %s160 = scalar_lea.sflag [#allocation3], %s159
        %s161 = sand.u32 %s28, 1
        %s162 = smul.addr %s161, 16
        %s163 = scalar_lea.vmem [#allocation2], %s162
        %p164 = pneg %p41
        %p165 = pneg %p38
        %p166 = pneg %p62
        %p167 = pneg %p59
        %p168 = pneg %p88
        %p169 = pneg %p85
        %s170 = sand.u32 %s75, 1
        %s171 = scalar_lea.sflag [#allocation4], %s170
        %s172 = sand.u32 %s75, 1
        %s173 = smul.addr %s172, 16
        %s174 = scalar_lea.vmem [#allocation7], %s173
        %v175 = vld [vmem:[%s150] sm:$0xff]
        %v176 = vld [vmem:[%s150 + $0x8] sm:$0xff]
        %v177 = vpack.c.bf16 %v175, %v175
        %v178 = vpack.c.bf16 %v176, %v176
        %v179 = vld [vmem:[#allocation5] sm:$0xff]
        %v180 = vld [vmem:[#allocation5 + $0x8] sm:$0xff]
        %v181 = vld [vmem:[#allocation5 + $0x10] sm:$0xff]
        %v182 = vld [vmem:[#allocation5 + $0x18] sm:$0xff]
        %v183 = vld [vmem:[#allocation5 + $0x20] sm:$0xff]
        %v184 = vld [vmem:[#allocation5 + $0x28] sm:$0xff]
        %v185 = vld [vmem:[#allocation5 + $0x30] sm:$0xff]
        %v186 = vld [vmem:[#allocation5 + $0x38] sm:$0xff]
        %v187 = vld [vmem:[#allocation5 + $0x40] sm:$0xff]
        %v188 = vld [vmem:[#allocation5 + $0x48] sm:$0xff]
        %v189 = vld [vmem:[#allocation5 + $0x50] sm:$0xff]
        %v190 = vld [vmem:[#allocation5 + $0x58] sm:$0xff]
        %v191 = vld [vmem:[#allocation5 + $0x60] sm:$0xff]
        %v192 = vld [vmem:[#allocation5 + $0x68] sm:$0xff]
        %v193 = vld [vmem:[#allocation5 + $0x70] sm:$0xff]
        %v194 = vld [vmem:[#allocation5 + $0x78] sm:$0xff]
        %v195 = vld [vmem:[#allocation5 + $0x80] sm:$0xff]
        %v196 = vld [vmem:[#allocation5 + $0x88] sm:$0xff]
        %v197 = vld [vmem:[#allocation5 + $0x90] sm:$0xff]
        %v198 = vld [vmem:[#allocation5 + $0x98] sm:$0xff]
        %v199 = vld [vmem:[#allocation5 + $0xa0] sm:$0xff]
        %v200 = vld [vmem:[#allocation5 + $0xa8] sm:$0xff]
        %v201 = vld [vmem:[#allocation5 + $0xb0] sm:$0xff]
        %v202 = vld [vmem:[#allocation5 + $0xb8] sm:$0xff]
        %v203 = vld [vmem:[#allocation5 + $0xc0] sm:$0xff]
        %v204 = vld [vmem:[#allocation5 + $0xc8] sm:$0xff]
        %v205 = vld [vmem:[#allocation5 + $0xd0] sm:$0xff]
        %v206 = vld [vmem:[#allocation5 + $0xd8] sm:$0xff]
        %v207 = vld [vmem:[#allocation5 + $0xe0] sm:$0xff]
        %v208 = vld [vmem:[#allocation5 + $0xe8] sm:$0xff]
        %v209 = vld [vmem:[#allocation5 + $0xf0] sm:$0xff]
        %v210 = vld [vmem:[#allocation5 + $0xf8] sm:$0xff]
        %v243 = vunpack.c.l.b16 %v179
        %v244 = vunpack.c.h.b16 %v179
        %v245 = vunpack.c.l.b16 %v180
        %v246 = vunpack.c.h.b16 %v180
        %v247 = vunpack.c.l.b16 %v181
        %v248 = vunpack.c.h.b16 %v181
        %v249 = vunpack.c.l.b16 %v182
        %v250 = vunpack.c.h.b16 %v182
        %v251 = vunpack.c.l.b16 %v183
        %v252 = vunpack.c.h.b16 %v183
        %v253 = vunpack.c.l.b16 %v184
        %v254 = vunpack.c.h.b16 %v184
        %v255 = vunpack.c.l.b16 %v185
        %v256 = vunpack.c.h.b16 %v185
        %v257 = vunpack.c.l.b16 %v186
        %v258 = vunpack.c.h.b16 %v186
        %v259 = vunpack.c.l.b16 %v187
        %v260 = vunpack.c.h.b16 %v187
        %v261 = vunpack.c.l.b16 %v188
        %v262 = vunpack.c.h.b16 %v188
        %v263 = vunpack.c.l.b16 %v189
        %v264 = vunpack.c.h.b16 %v189
        %v265 = vunpack.c.l.b16 %v190
        %v266 = vunpack.c.h.b16 %v190
        %v267 = vunpack.c.l.b16 %v191
        %v268 = vunpack.c.h.b16 %v191
        %v269 = vunpack.c.l.b16 %v192
        %v270 = vunpack.c.h.b16 %v192
        %v271 = vunpack.c.l.b16 %v193
        %v272 = vunpack.c.h.b16 %v193
        %v273 = vunpack.c.l.b16 %v194
        %v274 = vunpack.c.h.b16 %v194
        %v275 = vunpack.c.l.b16 %v195
        %v276 = vunpack.c.h.b16 %v195
        %v277 = vunpack.c.l.b16 %v196
        %v278 = vunpack.c.h.b16 %v196
        %v279 = vunpack.c.l.b16 %v197
        %v280 = vunpack.c.h.b16 %v197
        %v281 = vunpack.c.l.b16 %v198
        %v282 = vunpack.c.h.b16 %v198
        %v283 = vunpack.c.l.b16 %v199
        %v284 = vunpack.c.h.b16 %v199
        %v285 = vunpack.c.l.b16 %v200
        %v286 = vunpack.c.h.b16 %v200
        %v287 = vunpack.c.l.b16 %v201
        %v288 = vunpack.c.h.b16 %v201
        %v289 = vunpack.c.l.b16 %v202
        %v290 = vunpack.c.h.b16 %v202
        %v291 = vunpack.c.l.b16 %v203
        %v292 = vunpack.c.h.b16 %v203
        %v293 = vunpack.c.l.b16 %v204
        %v294 = vunpack.c.h.b16 %v204
        %v295 = vunpack.c.l.b16 %v205
        %v296 = vunpack.c.h.b16 %v205
        %v297 = vunpack.c.l.b16 %v206
        %v298 = vunpack.c.h.b16 %v206
        %v299 = vunpack.c.l.b16 %v207
        %v300 = vunpack.c.h.b16 %v207
        %v301 = vunpack.c.l.b16 %v208
        %v302 = vunpack.c.h.b16 %v208
        %v303 = vunpack.c.l.b16 %v209
        %v304 = vunpack.c.h.b16 %v209
        %v305 = vunpack.c.l.b16 %v210
        %v306 = vunpack.c.h.b16 %v210
        %v307 = vpack.c.b16 %v245, %v243
        %v308 = vpack.c.b16 %v246, %v244
        %v309 = vpack.c.b16 %v249, %v247
        %v310 = vpack.c.b16 %v250, %v248
        %v311 = vpack.c.b16 %v253, %v251
        %v312 = vpack.c.b16 %v254, %v252
        %v313 = vpack.c.b16 %v257, %v255
        %v314 = vpack.c.b16 %v258, %v256
        %v315 = vpack.c.b16 %v261, %v259
        %v316 = vpack.c.b16 %v262, %v260
        %v317 = vpack.c.b16 %v265, %v263
        %v318 = vpack.c.b16 %v266, %v264
        %v319 = vpack.c.b16 %v269, %v267
        %v320 = vpack.c.b16 %v270, %v268
        %v321 = vpack.c.b16 %v273, %v271
        %v322 = vpack.c.b16 %v274, %v272
        %v323 = vpack.c.b16 %v277, %v275
        %v324 = vpack.c.b16 %v278, %v276
        %v325 = vpack.c.b16 %v281, %v279
        %v326 = vpack.c.b16 %v282, %v280
        %v327 = vpack.c.b16 %v285, %v283
        %v328 = vpack.c.b16 %v286, %v284
        %v329 = vpack.c.b16 %v289, %v287
        %v330 = vpack.c.b16 %v290, %v288
        %v331 = vpack.c.b16 %v293, %v291
        %v332 = vpack.c.b16 %v294, %v292
        %v333 = vpack.c.b16 %v297, %v295
        %v334 = vpack.c.b16 %v298, %v296
        %v335 = vpack.c.b16 %v301, %v299
        %v336 = vpack.c.b16 %v302, %v300
        %v337 = vpack.c.b16 %v305, %v303
        %v338 = vpack.c.b16 %v306, %v304
        %371 = vmatprep.subr.bf16.mxu0 %v308
        %372 = vmatpush1.bf16.msra.mxu0 %v307
        %373 = vmatprep.subr.bf16.mxu0 %v310
        %374 = vmatpush1.bf16.msra.mxu0 %v309
        %375 = vmatprep.subr.bf16.mxu0 %v312
        %376 = vmatpush1.bf16.msra.mxu0 %v311
        %377 = vmatprep.subr.bf16.mxu0 %v314
        %378 = vmatpush1.bf16.msra.mxu0 %v313
        %379 = vmatprep.subr.bf16.mxu0 %v316
        %380 = vmatpush1.bf16.msra.mxu0 %v315
        %381 = vmatprep.subr.bf16.mxu0 %v318
        %382 = vmatpush1.bf16.msra.mxu0 %v317
        %383 = vmatprep.subr.bf16.mxu0 %v320
        %384 = vmatpush1.bf16.msra.mxu0 %v319
        %385 = vmatprep.subr.bf16.mxu0 %v322
        %386 = vmatpush1.bf16.msra.mxu0 %v321
        %387 = vmatprep.subr.bf16.mxu0 %v324
        %388 = vmatpush1.bf16.msra.mxu0 %v323
        %389 = vmatprep.subr.bf16.mxu0 %v326
        %390 = vmatpush1.bf16.msra.mxu0 %v325
        %391 = vmatprep.subr.bf16.mxu0 %v328
        %392 = vmatpush1.bf16.msra.mxu0 %v327
        %393 = vmatprep.subr.bf16.mxu0 %v330
        %394 = vmatpush1.bf16.msra.mxu0 %v329
        %395 = vmatprep.subr.bf16.mxu0 %v332
        %396 = vmatpush1.bf16.msra.mxu0 %v331
        %397 = vmatprep.subr.bf16.mxu0 %v334
        %398 = vmatpush1.bf16.msra.mxu0 %v333
        %399 = vmatprep.subr.bf16.mxu0 %v336
        %400 = vmatpush1.bf16.msra.mxu0 %v335
        %401 = vmatprep.subr.bf16.mxu0 %v338
        %402 = vmatpush1.bf16.msra.mxu0 %v337
        %403 = vmatprep.mubr.bf16.mxu0 %v178
        %404 = vmatmul.mubr.bf16.gmra.mrb[0].mxu0 %v177
        %v405 = vpop.f32.mrb[0].mxu0
        %v406 = vadd.f32 0.0, %v405
        %v407 = vpop.f32.mrb[0].mxu0
        %v408 = vadd.f32 0.0, %v407
        %v409 = vpop.f32.mrb[0].mxu0
        %v410 = vpop.f32.mrb[0].mxu0
        %411 = vdwg.mxu0
        %412 = vst [vmem:[%s174] sm:$0xff] %v406
        %413 = vst [vmem:[%s174 + $0x8] sm:$0xff] %v408
        %s414 = sand.u32 %s75, 1
        %s415 = scalar_lea.sflag [#allocation4], %s414
        %s416 = sand.u32 %s75, 1
        %s417 = smul.addr %s416, 16
        %s418 = scalar_lea.vmem [#allocation7], %s417
        // Predicated region
        $region37: #{tpu_custom_call.1} parent=27 // pred_check
          %p419 = pneg %p85
        $region38: #{tpu_custom_call.1} parent=27 // pred_check_branch
          %421 = sbr.rel (%p419) target = $region40
        $region39: #{tpu_custom_call.1} parent=27 // pred_region
          %s423 = ssub.s32 256, 256
          %424 = vsyncadd %s415, %s423
          %s425 = smul.addr %s20, 2
          %s426 = smul.addr %s425, 128
          %s427 = scalar_lea.hbm %s2, %s426
          %s429 = sshll.u32 %s418, 4
          %s430 = int_to_ptr.vmem [resolvable:$true] %s429
          %432 = dma.vmem_to_hbm [thread:$0]  %s430, 256, %s427, %s415
        $region40: #{tpu_custom_call.1} parent=27 // pred_fallthru
          _
      $region28: #{tpu_custom_call.1} parent=5 // pred_fallthru
        _
      %p433 = scmp.le.s32.totalorder 2, %s15
      // Predicated region
      $region41: #{tpu_custom_call.1} parent=5 // pred_check
        %p434 = pneg %p433
      $region42: #{tpu_custom_call.1} parent=5 // pred_check_branch
        %436 = sbr.rel (%p434) target = $region44
      $region43: #{tpu_custom_call.1} parent=5 // pred_region
        %s437 = ssub.s32 %s15, 2
        // Predicated region
        $region45: #{tpu_custom_call.1} parent=43 // pred_check
          %p438 = pneg %p91
        $region46: #{tpu_custom_call.1} parent=43 // pred_check_branch
          %440 = sbr.rel (%p438) target = $region48
        $region47: #{tpu_custom_call.1} parent=43 // pred_region
          %s441 = sand.u32 %s76, 1
          %s442 = scalar_lea.sflag [#allocation4], %s441
          %s443 = sand.u32 %s76, 1
          %s444 = smul.addr %s443, 16
          %s445 = scalar_lea.vmem [#allocation7], %s444
          %446 = dma.done %s442, 256
        $region48: #{tpu_custom_call.1} parent=43 // pred_fallthru
          _
      $region44: #{tpu_custom_call.1} parent=5 // pred_fallthru
        _
    $region6: #{tpu_custom_call.1} parent=1 // loop_footer
      %s19 = sadd.s32 1, %s15
    $region7: #{tpu_custom_call.1} parent=1 // loop_footer_branch
      %14 = sbr.rel target = $region3
    $region8: #{tpu_custom_call.1} parent=1 // loop_exit
      _
    %447 = vsyncpa [#allocation3], 1
    %s448 = scalar_lea.sflag [#allocation3], 1
    %449 = vsyncpa %s448, 1
    %450 = vsyncpa [#allocation6], 1
    %451 = vsyncpa [#allocation4], 1
    %s452 = scalar_lea.sflag [#allocation4], 1
    %453 = vsyncpa %s452, 1

</llo_original>
